<compile_context>
chip_gen: v7x
topology: tpu7x:2x2x1
jax: 0.10.0
libtpu: 0.0.40
codegen_flags: <defaults>
</compile_context>

<pallas_src>
import functools

import jax
import jax.numpy as jnp
from jax.experimental import pallas as pl
from jax.experimental.pallas import tpu as pltpu


def _round_up(x, m):
    return ((x + m - 1) // m) * m


# ------------- Kernel A: fused encoder -> medium -> masked mean pool --------

def _encode_pool_kernel(vlen_ref, alen_ref,
                        v_ref, a_ref,
                        wv_ref, bv_ref, wa_ref, ba_ref, wm_ref, bm_ref,
                        ctx_ref):
    b = pl.program_id(0)
    # per-modality encoder projections (bf16 MXU, f32 accumulate)
    v = jnp.dot(v_ref[0], wv_ref[...], preferred_element_type=jnp.float32)
    v = jnp.maximum(v + bv_ref[...], 0.0)
    a = jnp.dot(a_ref[0], wa_ref[...], preferred_element_type=jnp.float32)
    a = jnp.maximum(a + ba_ref[...], 0.0)
    # medium fusion projection (shared weights across both modality streams)
    fv = jnp.dot(v.astype(wm_ref.dtype), wm_ref[...],
                 preferred_element_type=jnp.float32)
    fv = jnp.maximum(fv + bm_ref[...], 0.0)                      # (Tv, D)
    fa = jnp.dot(a.astype(wm_ref.dtype), wm_ref[...],
                 preferred_element_type=jnp.float32)
    fa = jnp.maximum(fa + bm_ref[...], 0.0)                      # (Ta, D)
    # masked mean pool over time; masks from SMEM lengths (no HBM mask arrays)
    vlen = vlen_ref[b]
    alen = alen_ref[b]
    tv = fv.shape[0]
    ta = fa.shape[0]
    vmask = (jax.lax.broadcasted_iota(jnp.int32, (tv, 1), 0) < vlen)
    amask = (jax.lax.broadcasted_iota(jnp.int32, (ta, 1), 0) < alen)
    s = (jnp.sum(fv * vmask.astype(jnp.float32), axis=0, keepdims=True)
         + jnp.sum(fa * amask.astype(jnp.float32), axis=0, keepdims=True))
    cnt = jnp.maximum((vlen + alen).astype(jnp.float32), 1.0)
    ctx_ref[0] = (s * (1.0 / cnt)).astype(ctx_ref.dtype)


def fused_encode_pool(video, audio, vlens, alens, params):
    # TODO(synk): for very long sequences, tile the time axis with a VMEM
    # accumulator instead of one full-time block per batch.
    B, Tv, Dv = video.shape
    _, Ta, Da = audio.shape
    D = params["w_video"].shape[1]
    grid_spec = pltpu.PrefetchScalarGridSpec(
        num_scalar_prefetch=2,
        grid=(B,),
        in_specs=[
            pl.BlockSpec((1, Tv, Dv), lambda b, vl, al: (b, 0, 0)),
            pl.BlockSpec((1, Ta, Da), lambda b, vl, al: (b, 0, 0)),
            pl.BlockSpec((Dv, D), lambda b, vl, al: (0, 0)),
            pl.BlockSpec((1, D), lambda b, vl, al: (0, 0)),
            pl.BlockSpec((Da, D), lambda b, vl, al: (0, 0)),
            pl.BlockSpec((1, D), lambda b, vl, al: (0, 0)),
            pl.BlockSpec((D, D), lambda b, vl, al: (0, 0)),
            pl.BlockSpec((1, D), lambda b, vl, al: (0, 0)),
        ],
        out_specs=pl.BlockSpec((1, 1, D), lambda b, vl, al: (b, 0, 0)),
    )
    return pl.pallas_call(
        _encode_pool_kernel,
        out_shape=jax.ShapeDtypeStruct((B, 1, D), jnp.float32),
        grid_spec=grid_spec,
        compiler_params=pltpu.CompilerParams(dimension_semantics=("parallel",)),
    )(vlens, alens, video, audio,
      params["w_video"], params["b_video"],
      params["w_audio"], params["b_audio"],
      params["w_medium"], params["b_medium"])                    # (B, 1, D) f32


# ------------- Kernel B: embedding row gather via scalar prefetch -----------

def _embed_kernel(ids_ref, lens_ref, row_ref, o_ref, *, pad_id):
    b = pl.program_id(0)
    t = pl.program_id(1)
    tok = ids_ref[b, t]
    keep = jnp.logical_and(tok != pad_id, t < lens_ref[b])
    row = row_ref[...]                                           # (1, 1, D)
    o_ref[...] = jnp.where(keep, row, jnp.zeros_like(row))


def embed_gather(targets, target_lengths, table, pad_id):
    # TODO(synk): for long target sequences, batch multiple rows per grid step
    # with a manual make_async_copy gather to amortize per-step overhead.
    B, Tt = targets.shape
    V, D = table.shape
    table3 = table.reshape(V, 1, D)
    grid_spec = pltpu.PrefetchScalarGridSpec(
        num_scalar_prefetch=2,
        grid=(B, Tt),
        in_specs=[
            pl.BlockSpec((1, 1, D), lambda b, t, ids, lens: (ids[b, t], 0, 0)),
        ],
        out_specs=pl.BlockSpec((1, 1, D), lambda b, t, ids, lens: (b, t, 0)),
    )
    return pl.pallas_call(
        functools.partial(_embed_kernel, pad_id=pad_id),
        out_shape=jax.ShapeDtypeStruct((B, Tt, D), table.dtype),
        grid_spec=grid_spec,
        compiler_params=pltpu.CompilerParams(
            dimension_semantics=("parallel", "parallel")),
    )(targets.astype(jnp.int32), target_lengths.astype(jnp.int32), table3)


# ------------- Kernel C: tiled decoder (hidden scratch + vocab tiles) -------

def _decoder_kernel(emb_ref, ctx_ref, wd_ref, bd_ref, wo_ref, bo_ref,
                    o_ref, h_ref):
    # compute hidden once per (batch, token-tile); reuse across vocab tiles
    @pl.when(pl.program_id(2) == 0)
    def _():
        h = jnp.dot(emb_ref[0], wd_ref[...], preferred_element_type=jnp.float32)
        h = jnp.maximum(h + bd_ref[...] + ctx_ref[0], 0.0)
        h_ref[...] = h.astype(h_ref.dtype)
    logits = jnp.dot(h_ref[...], wo_ref[...],
                     preferred_element_type=jnp.float32)
    o_ref[0] = (logits + bo_ref[...]).astype(o_ref.dtype)


def pallas_decoder(emb, ctx, w_dec, b_dec, w_out_p, b_out_p, *, tt, tv):
    B, Tt, D = emb.shape
    Vp = w_out_p.shape[1]
    grid = (B, Tt // tt, Vp // tv)
    return pl.pallas_call(
        _decoder_kernel,
        out_shape=jax.ShapeDtypeStruct((B, Tt, Vp), jnp.float32),
        grid=grid,
        in_specs=[
            pl.BlockSpec((1, tt, D), lambda b, t, v: (b, t, 0)),   # emb tile
            pl.BlockSpec((1, 1, D), lambda b, t, v: (b, 0, 0)),    # ctx (reused)
            pl.BlockSpec((D, D), lambda b, t, v: (0, 0)),          # Wd (resident)
            pl.BlockSpec((1, D), lambda b, t, v: (0, 0)),          # bd (resident)
            pl.BlockSpec((D, tv), lambda b, t, v: (0, v)),         # Wout tile
            pl.BlockSpec((1, tv), lambda b, t, v: (0, v)),         # bout tile
        ],
        out_specs=pl.BlockSpec((1, tt, tv), lambda b, t, v: (b, t, v)),
        scratch_shapes=[pltpu.VMEM((tt, D), jnp.bfloat16)],
        compiler_params=pltpu.CompilerParams(
            dimension_semantics=("parallel", "parallel", "arbitrary"),
            vmem_limit_bytes=32 * 1024 * 1024),
    )(emb, ctx, w_dec, b_dec, w_out_p, b_out_p)


# ----------------------------- Model wrapper --------------------------------

def init_params(key, *, vocab_size, d_video, d_audio, d_model):
    ks = jax.random.split(key, 8)
    s = 0.02
    bf = jnp.bfloat16
    return {
        "embed_table": (jax.random.normal(ks[0], (vocab_size, d_model)) * s).astype(bf),
        "w_video": (jax.random.normal(ks[1], (d_video, d_model)) * s).astype(bf),
        "b_video": jnp.zeros((1, d_model), jnp.float32),
        "w_audio": (jax.random.normal(ks[2], (d_audio, d_model)) * s).astype(bf),
        "b_audio": jnp.zeros((1, d_model), jnp.float32),
        "w_medium": (jax.random.normal(ks[3], (d_model, d_model)) * s).astype(bf),
        "b_medium": jnp.zeros((1, d_model), jnp.float32),
        "w_dec": (jax.random.normal(ks[4], (d_model, d_model)) * s).astype(bf),
        "b_dec": jnp.zeros((1, d_model), jnp.float32),
        "w_out": (jax.random.normal(ks[5], (d_model, vocab_size)) * s).astype(bf),
        "b_out": jnp.zeros((1, vocab_size), jnp.float32),
    }


def encoder_decoder_forward(params, pad_id,
                            video_inputs, video_input_lengths,
                            audio_inputs, audio_input_lengths,
                            targets, target_lengths):
    B, Tt = targets.shape
    V = params["w_out"].shape[1]

    video = video_inputs.astype(jnp.bfloat16)
    audio = audio_inputs.astype(jnp.bfloat16)

    # encoder + medium + masked mean pool (single fused Pallas pass)
    ctx = fused_encode_pool(video, audio,
                            video_input_lengths.astype(jnp.int32),
                            audio_input_lengths.astype(jnp.int32),
                            params)                              # (B, 1, D) f32

    # embedder: scalar-prefetch row gather with pad/length masking in-kernel
    emb = embed_gather(targets, target_lengths,
                       params["embed_table"], pad_id)            # (B, Tt, D) bf16

    # decoder: pad vocab to a multiple of 128 for lane-dense output stores
    Vp = _round_up(V, 128)
    w_out_p = jnp.pad(params["w_out"], ((0, 0), (0, Vp - V)))
    b_out_p = jnp.pad(params["b_out"], ((0, 0), (0, Vp - V)))

    tt = Tt
    for cand in (256, 128, 64, 32, 16, 8):
        if Tt % cand == 0:
            tt = cand
            break
    tv = 128
    for cand in (512, 256, 128):
        if Vp % cand == 0:
            tv = cand
            break

    logits_p = pallas_decoder(emb, ctx, params["w_dec"], params["b_dec"],
                              w_out_p, b_out_p, tt=tt, tv=tv)     # (B, Tt, Vp)
    return logits_p[:, :, :V]


# ----------------------------- pure-JAX reference ---------------------------

def _reference_forward(params, pad_id, video, vlens, audio, alens,
                       targets, tlens):
    f32 = jnp.float32
    bf = jnp.bfloat16

    def lin(x, w, b):
        return jnp.maximum(jnp.dot(x, w, preferred_element_type=f32) + b, 0.0)

    venc = lin(video.astype(bf), params["w_video"], params["b_video"])
    aenc = lin(audio.astype(bf), params["w_audio"], params["b_audio"])
    fv = lin(venc.astype(bf), params["w_medium"], params["b_medium"])
    fa = lin(aenc.astype(bf), params["w_medium"], params["b_medium"])
    Tv, Ta = fv.shape[1], fa.shape[1]
    vm = (jnp.arange(Tv)[None, :] < vlens[:, None]).astype(f32)[..., None]
    am = (jnp.arange(Ta)[None, :] < alens[:, None]).astype(f32)[..., None]
    s = (fv * vm).sum(1) + (fa * am).sum(1)
    cnt = jnp.maximum((vlens + alens).astype(f32), 1.0)[:, None]
    ctx = s / cnt                                                # (B, D)

    Tt = targets.shape[1]
    emb = jnp.take(params["embed_table"], targets, axis=0)       # (B, Tt, D)
    keep = (targets != pad_id) & (jnp.arange(Tt)[None, :] < tlens[:, None])
    emb = jnp.where(keep[..., None], emb, 0).astype(bf)

    h = (jnp.dot(emb, params["w_dec"], preferred_element_type=f32)
         + params["b_dec"] + ctx[:, None, :])
    h = jnp.maximum(h, 0.0)
    logits = (jnp.dot(h.astype(bf), params["w_out"], preferred_element_type=f32)
              + params["b_out"])
    return logits


# --------------------------------- main --------------------------------------

if __name__ == "__main__":
    VOCAB_SIZE = 16
    PAD_ID = 0
    B, Tv, Ta, Tt = 2, 16, 16, 16
    D_VIDEO, D_AUDIO, D_MODEL = 128, 128, 128

    key = jax.random.PRNGKey(0)
    k_p, k_v, k_a, k_t = jax.random.split(key, 4)

    params = init_params(k_p, vocab_size=VOCAB_SIZE, d_video=D_VIDEO,
                         d_audio=D_AUDIO, d_model=D_MODEL)

    video_inputs = jax.random.normal(k_v, (B, Tv, D_VIDEO), jnp.float32)
    audio_inputs = jax.random.normal(k_a, (B, Ta, D_AUDIO), jnp.float32)
    video_input_lengths = jnp.array([Tv, 11], dtype=jnp.int32)
    audio_input_lengths = jnp.array([Ta, 9], dtype=jnp.int32)
    targets = jax.random.randint(k_t, (B, Tt), 0, VOCAB_SIZE, dtype=jnp.int32)
    target_lengths = jnp.array([Tt, 7], dtype=jnp.int32)

    logits = encoder_decoder_forward(
        params, PAD_ID,
        video_inputs, video_input_lengths,
        audio_inputs, audio_input_lengths,
        targets, target_lengths)
    logits = jax.block_until_ready(logits)

    assert logits.shape == (B, Tt, VOCAB_SIZE)
    assert jnp.all(jnp.isfinite(logits))

    ref = _reference_forward(params, PAD_ID,
                             video_inputs, video_input_lengths,
                             audio_inputs, audio_input_lengths,
                             targets, target_lengths)
    ref = jax.block_until_ready(ref)
    assert jnp.allclose(logits, ref, atol=1e-2, rtol=5e-2), (
        float(jnp.max(jnp.abs(logits - ref))))

    print("KERNEL_OK")
</pallas_src>

<mosaic_0001>
module attributes {stable_mosaic.version = 11 : i64} {
  func.func @_encode_pool_kernel(%arg0: i32, %arg1: memref<2xi32, #tpu.memory_space<smem>>, %arg2: memref<2xi32, #tpu.memory_space<smem>>, %arg3: memref<1x16x128xbf16, #tpu.memory_space<vmem>>, %arg4: memref<1x16x128xbf16, #tpu.memory_space<vmem>>, %arg5: memref<128x128xbf16, #tpu.memory_space<vmem>>, %arg6: memref<1x128xf32, #tpu.memory_space<vmem>>, %arg7: memref<128x128xbf16, #tpu.memory_space<vmem>>, %arg8: memref<1x128xf32, #tpu.memory_space<vmem>>, %arg9: memref<128x128xbf16, #tpu.memory_space<vmem>>, %arg10: memref<1x128xf32, #tpu.memory_space<vmem>>, %arg11: memref<1x1x128xf32, #tpu.memory_space<vmem>>) attributes {dimension_semantics = [#tpu.dimension_semantics<parallel>], iteration_bounds = array<i64: 2>, scalar_prefetch = 2 : i64, scratch_operands = 0 : i64, tpu.core_type = #tpu.core_type<tc>, window_params = [{transform_indices = @transform_0, window_bounds = array<i64: 1, 16, 128>}, {transform_indices = @transform_1, window_bounds = array<i64: 1, 16, 128>}, {pipeline_mode = #tpu.pipeline_mode<synchronous>, transform_indices = @transform_2, window_bounds = array<i64: 128, 128>}, {pipeline_mode = #tpu.pipeline_mode<synchronous>, transform_indices = @transform_3, window_bounds = array<i64: 1, 128>}, {pipeline_mode = #tpu.pipeline_mode<synchronous>, transform_indices = @transform_4, window_bounds = array<i64: 128, 128>}, {pipeline_mode = #tpu.pipeline_mode<synchronous>, transform_indices = @transform_5, window_bounds = array<i64: 1, 128>}, {pipeline_mode = #tpu.pipeline_mode<synchronous>, transform_indices = @transform_6, window_bounds = array<i64: 128, 128>}, {pipeline_mode = #tpu.pipeline_mode<synchronous>, transform_indices = @transform_7, window_bounds = array<i64: 1, 128>}, {transform_indices = @transform_8, window_bounds = array<i64: 1, 1, 128>}]} {
    %c0 = arith.constant 0 : index
    %c0_0 = arith.constant 0 : index
    %c0_1 = arith.constant 0 : index
    %0 = vector.load %arg3[%c0, %c0_0, %c0_1] : memref<1x16x128xbf16, #tpu.memory_space<vmem>>, vector<1x16x128xbf16>
    %1 = vector.shape_cast %0 : vector<1x16x128xbf16> to vector<16x128xbf16>
    %c0_2 = arith.constant 0 : index
    %c0_3 = arith.constant 0 : index
    %2 = vector.load %arg5[%c0_2, %c0_3] : memref<128x128xbf16, #tpu.memory_space<vmem>>, vector<128x128xbf16>
    %cst = arith.constant dense<0.000000e+00> : vector<16x128xf32>
    %3 = tpu.matmul %1, %2, %cst {dimension_numbers = #tpu.dot_dimension_numbers<[1], [0], [0], [1], [0, 0, 1, 1], [], []>} : vector<16x128xbf16>, vector<128x128xbf16>, vector<16x128xf32> -> vector<16x128xf32>
    %c0_4 = arith.constant 0 : index
    %c0_5 = arith.constant 0 : index
    %4 = vector.load %arg6[%c0_4, %c0_5] : memref<1x128xf32, #tpu.memory_space<vmem>>, vector<1x128xf32>
    %5 = vector.broadcast %4 : vector<1x128xf32> to vector<16x128xf32>
    %6 = arith.addf %3, %5 : vector<16x128xf32>
    %cst_6 = arith.constant 0.000000e+00 : f32
    %7 = vector.broadcast %cst_6 : f32 to vector<16x128xf32>
    %8 = arith.maximumf %6, %7 : vector<16x128xf32>
    %c0_7 = arith.constant 0 : index
    %c0_8 = arith.constant 0 : index
    %c0_9 = arith.constant 0 : index
    %9 = vector.load %arg4[%c0_7, %c0_8, %c0_9] : memref<1x16x128xbf16, #tpu.memory_space<vmem>>, vector<1x16x128xbf16>
    %10 = vector.shape_cast %9 : vector<1x16x128xbf16> to vector<16x128xbf16>
    %c0_10 = arith.constant 0 : index
    %c0_11 = arith.constant 0 : index
    %11 = vector.load %arg7[%c0_10, %c0_11] : memref<128x128xbf16, #tpu.memory_space<vmem>>, vector<128x128xbf16>
    %cst_12 = arith.constant dense<0.000000e+00> : vector<16x128xf32>
    %12 = tpu.matmul %10, %11, %cst_12 {dimension_numbers = #tpu.dot_dimension_numbers<[1], [0], [0], [1], [0, 0, 1, 1], [], []>} : vector<16x128xbf16>, vector<128x128xbf16>, vector<16x128xf32> -> vector<16x128xf32>
    %c0_13 = arith.constant 0 : index
    %c0_14 = arith.constant 0 : index
    %13 = vector.load %arg8[%c0_13, %c0_14] : memref<1x128xf32, #tpu.memory_space<vmem>>, vector<1x128xf32>
    %14 = vector.broadcast %13 : vector<1x128xf32> to vector<16x128xf32>
    %15 = arith.addf %12, %14 : vector<16x128xf32>
    %cst_15 = arith.constant 0.000000e+00 : f32
    %16 = vector.broadcast %cst_15 : f32 to vector<16x128xf32>
    %17 = arith.maximumf %15, %16 : vector<16x128xf32>
    %18 = arith.truncf %8 : vector<16x128xf32> to vector<16x128xbf16>
    %c0_16 = arith.constant 0 : index
    %c0_17 = arith.constant 0 : index
    %19 = vector.load %arg9[%c0_16, %c0_17] : memref<128x128xbf16, #tpu.memory_space<vmem>>, vector<128x128xbf16>
    %cst_18 = arith.constant dense<0.000000e+00> : vector<16x128xf32>
    %20 = tpu.matmul %18, %19, %cst_18 {dimension_numbers = #tpu.dot_dimension_numbers<[1], [0], [0], [1], [0, 0, 1, 1], [], []>} : vector<16x128xbf16>, vector<128x128xbf16>, vector<16x128xf32> -> vector<16x128xf32>
    %c0_19 = arith.constant 0 : index
    %c0_20 = arith.constant 0 : index
    %21 = vector.load %arg10[%c0_19, %c0_20] : memref<1x128xf32, #tpu.memory_space<vmem>>, vector<1x128xf32>
    %22 = vector.broadcast %21 : vector<1x128xf32> to vector<16x128xf32>
    %23 = arith.addf %20, %22 : vector<16x128xf32>
    %cst_21 = arith.constant 0.000000e+00 : f32
    %24 = vector.broadcast %cst_21 : f32 to vector<16x128xf32>
    %25 = arith.maximumf %23, %24 : vector<16x128xf32>
    %26 = arith.truncf %17 : vector<16x128xf32> to vector<16x128xbf16>
    %c0_22 = arith.constant 0 : index
    %c0_23 = arith.constant 0 : index
    %27 = vector.load %arg9[%c0_22, %c0_23] : memref<128x128xbf16, #tpu.memory_space<vmem>>, vector<128x128xbf16>
    %cst_24 = arith.constant dense<0.000000e+00> : vector<16x128xf32>
    %28 = tpu.matmul %26, %27, %cst_24 {dimension_numbers = #tpu.dot_dimension_numbers<[1], [0], [0], [1], [0, 0, 1, 1], [], []>} : vector<16x128xbf16>, vector<128x128xbf16>, vector<16x128xf32> -> vector<16x128xf32>
    %c0_25 = arith.constant 0 : index
    %c0_26 = arith.constant 0 : index
    %29 = vector.load %arg10[%c0_25, %c0_26] : memref<1x128xf32, #tpu.memory_space<vmem>>, vector<1x128xf32>
    %30 = vector.broadcast %29 : vector<1x128xf32> to vector<16x128xf32>
    %31 = arith.addf %28, %30 : vector<16x128xf32>
    %cst_27 = arith.constant 0.000000e+00 : f32
    %32 = vector.broadcast %cst_27 : f32 to vector<16x128xf32>
    %33 = arith.maximumf %31, %32 : vector<16x128xf32>
    %34 = arith.index_cast %arg0 : i32 to index
    %35 = memref.load %arg1[%34] : memref<2xi32, #tpu.memory_space<smem>>
    %36 = arith.index_cast %arg0 : i32 to index
    %37 = memref.load %arg2[%36] : memref<2xi32, #tpu.memory_space<smem>>
    %38 = tpu.iota {dimensions = array<i32: 0>} : vector<16x1xi32>
    %39 = vector.broadcast %35 : i32 to vector<16x1xi32>
    %40 = arith.cmpi slt, %38, %39 : vector<16x1xi32>
    %41 = tpu.iota {dimensions = array<i32: 0>} : vector<16x1xi32>
    %42 = vector.broadcast %37 : i32 to vector<16x1xi32>
    %43 = arith.cmpi slt, %41, %42 : vector<16x1xi32>
    %44 = arith.extui %40 : vector<16x1xi1> to vector<16x1xi32>
    %45 = arith.sitofp %44 : vector<16x1xi32> to vector<16x1xf32>
    %46 = vector.broadcast %45 : vector<16x1xf32> to vector<16x128xf32>
    %47 = arith.mulf %25, %46 : vector<16x128xf32>
    %cst_28 = arith.constant dense<0.000000e+00> : vector<128xf32>
    %48 = vector.multi_reduction <add>, %47, %cst_28 [0] : vector<16x128xf32> to vector<128xf32>
    %49 = vector.shape_cast %48 : vector<128xf32> to vector<1x128xf32>
    %50 = arith.extui %43 : vector<16x1xi1> to vector<16x1xi32>
    %51 = arith.sitofp %50 : vector<16x1xi32> to vector<16x1xf32>
    %52 = vector.broadcast %51 : vector<16x1xf32> to vector<16x128xf32>
    %53 = arith.mulf %33, %52 : vector<16x128xf32>
    %cst_29 = arith.constant dense<0.000000e+00> : vector<128xf32>
    %54 = vector.multi_reduction <add>, %53, %cst_29 [0] : vector<16x128xf32> to vector<128xf32>
    %55 = vector.shape_cast %54 : vector<128xf32> to vector<1x128xf32>
    %56 = arith.addf %49, %55 : vector<1x128xf32>
    %57 = arith.addi %35, %37 : i32
    %58 = arith.sitofp %57 : i32 to f32
    %cst_30 = arith.constant 1.000000e+00 : f32
    %59 = arith.maximumf %58, %cst_30 : f32
    %cst_31 = arith.constant 1.000000e+00 : f32
    %60 = arith.divf %cst_31, %59 : f32
    %61 = vector.broadcast %60 : f32 to vector<1x128xf32>
    %62 = arith.mulf %56, %61 : vector<1x128xf32>
    %c0_32 = arith.constant 0 : index
    %c0_33 = arith.constant 0 : index
    %c0_34 = arith.constant 0 : index
    %63 = vector.load %arg11[%c0_32, %c0_33, %c0_34] : memref<1x1x128xf32, #tpu.memory_space<vmem>>, vector<1x1x128xf32>
    %64 = vector.shape_cast %63 : vector<1x1x128xf32> to vector<1x128xf32>
    %65 = vector.shape_cast %62 : vector<1x128xf32> to vector<1x1x128xf32>
    tpu.vector_store %arg11[%c0_32, %c0_33, %c0_34], %65 {strides = array<i32>} : memref<1x1x128xf32, #tpu.memory_space<vmem>>, vector<1x1x128xf32>,
    return
  }
  func.func @transform_0(%arg0: i32, %arg1: memref<2xi32, #tpu.memory_space<smem>>, %arg2: memref<2xi32, #tpu.memory_space<smem>>) -> (i32, i32, i32) {
    %c0_i32 = arith.constant 0 : i32
    %c0_i32_0 = arith.constant 0 : i32
    %c0_i32_1 = arith.constant 0 : i32
    return %arg0, %c0_i32, %c0_i32_0 : i32, i32, i32
  }
  func.func @transform_1(%arg0: i32, %arg1: memref<2xi32, #tpu.memory_space<smem>>, %arg2: memref<2xi32, #tpu.memory_space<smem>>) -> (i32, i32, i32) {
    %c0_i32 = arith.constant 0 : i32
    %c0_i32_0 = arith.constant 0 : i32
    %c0_i32_1 = arith.constant 0 : i32
    return %arg0, %c0_i32, %c0_i32_0 : i32, i32, i32
  }
  func.func @transform_2(%arg0: i32, %arg1: memref<2xi32, #tpu.memory_space<smem>>, %arg2: memref<2xi32, #tpu.memory_space<smem>>) -> (i32, i32) {
    %c0_i32 = arith.constant 0 : i32
    %c0_i32_0 = arith.constant 0 : i32
    %c0_i32_1 = arith.constant 0 : i32
    return %c0_i32, %c0_i32_0 : i32, i32
  }
  func.func @transform_3(%arg0: i32, %arg1: memref<2xi32, #tpu.memory_space<smem>>, %arg2: memref<2xi32, #tpu.memory_space<smem>>) -> (i32, i32) {
    %c0_i32 = arith.constant 0 : i32
    %c0_i32_0 = arith.constant 0 : i32
    %c0_i32_1 = arith.constant 0 : i32
    return %c0_i32, %c0_i32_0 : i32, i32
  }
  func.func @transform_4(%arg0: i32, %arg1: memref<2xi32, #tpu.memory_space<smem>>, %arg2: memref<2xi32, #tpu.memory_space<smem>>) -> (i32, i32) {
    %c0_i32 = arith.constant 0 : i32
    %c0_i32_0 = arith.constant 0 : i32
    %c0_i32_1 = arith.constant 0 : i32
    return %c0_i32, %c0_i32_0 : i32, i32
  }
  func.func @transform_5(%arg0: i32, %arg1: memref<2xi32, #tpu.memory_space<smem>>, %arg2: memref<2xi32, #tpu.memory_space<smem>>) -> (i32, i32) {
    %c0_i32 = arith.constant 0 : i32
    %c0_i32_0 = arith.constant 0 : i32
    %c0_i32_1 = arith.constant 0 : i32
    return %c0_i32, %c0_i32_0 : i32, i32
  }
  func.func @transform_6(%arg0: i32, %arg1: memref<2xi32, #tpu.memory_space<smem>>, %arg2: memref<2xi32, #tpu.memory_space<smem>>) -> (i32, i32) {
    %c0_i32 = arith.constant 0 : i32
    %c0_i32_0 = arith.constant 0 : i32
    %c0_i32_1 = arith.constant 0 : i32
    return %c0_i32, %c0_i32_0 : i32, i32
  }
  func.func @transform_7(%arg0: i32, %arg1: memref<2xi32, #tpu.memory_space<smem>>, %arg2: memref<2xi32, #tpu.memory_space<smem>>) -> (i32, i32) {
    %c0_i32 = arith.constant 0 : i32
    %c0_i32_0 = arith.constant 0 : i32
    %c0_i32_1 = arith.constant 0 : i32
    return %c0_i32, %c0_i32_0 : i32, i32
  }
  func.func @transform_8(%arg0: i32, %arg1: memref<2xi32, #tpu.memory_space<smem>>, %arg2: memref<2xi32, #tpu.memory_space<smem>>) -> (i32, i32, i32) {
    %c0_i32 = arith.constant 0 : i32
    %c0_i32_0 = arith.constant 0 : i32
    %c0_i32_1 = arith.constant 0 : i32
    return %arg0, %c0_i32, %c0_i32_0 : i32, i32, i32
  }
}

</mosaic_0001>

<llo_original>
// kernel: tpu_custom_call.1
$region0: #{tpu_custom_call.1}
  #allocation0 [shape = 'u32[]', space=smem, size = 0x4, offset = 0x4, fixed_abs, tag = 'smem constant byte address 0x4 - core index']
  #allocation1 [shape = 'u32[144,128]{1,0:T(1,128)}', space=vmem, size = 0x12000, scoped, tag = 'internal scratch']
  #allocation2 [shape = 's32[1]{0}', space=sflag, size = 0x4, scoped, tag = 'scoped memory for tpu_custom_call.1']
  #allocation3 [shape = 'u8[512]{0}', space=smem, size = 0x200, scoped, tag = 'prefetched SMEM operand 0']
  #allocation4 [shape = 'u8[512]{0}', space=smem, size = 0x200, scoped, tag = 'prefetched SMEM operand 1']
  %s0 = inlined_call_operand.hbm [shape: s32[2], index: 0, kind: input, shape index: {}]
  %s1 = inlined_call_operand.vmem [shape: s32[2], index: 1, kind: input, shape index: {}]
  %s2 = inlined_call_operand.hbm [shape: bf16[2,16,128], index: 2, kind: input, shape index: {}]
  %s3 = inlined_call_operand.hbm [shape: bf16[2,16,128], index: 3, kind: input, shape index: {}]
  %s4 = inlined_call_operand.hbm [shape: bf16[128,128], index: 4, kind: input, shape index: {}]
  %s5 = inlined_call_operand.vmem [shape: f32[1,128], index: 5, kind: input, shape index: {}]
  %s6 = inlined_call_operand.hbm [shape: bf16[128,128], index: 6, kind: input, shape index: {}]
  %s7 = inlined_call_operand.vmem [shape: f32[1,128], index: 7, kind: input, shape index: {}]
  %s8 = inlined_call_operand.hbm [shape: bf16[128,128], index: 8, kind: input, shape index: {}]
  %s9 = inlined_call_operand.vmem [shape: f32[1,128], index: 9, kind: input, shape index: {}]
  %s10 = inlined_call_operand.hbm [shape: f32[2,1,128], index: 10, kind: output, shape index: {}]
  %s11 = sld [smem:[#allocation0]]
  $region85: #{tpu_custom_call.1} parent=0
    _
  %s13 = ssub.s32 1, %s11
  %s14 = scalar_select 0, %s13, %s11
  %16 = dma.hbm_to_smem %s0, 16, [#allocation3], [#allocation2]
  %s17 = sshll.u32 %s1, 4
  %s18 = int_to_ptr.vmem [resolvable:$true] %s17
  %20 = dma.vmem_to_smem %s18, 16, [#allocation4], [#allocation2]
  %21 = dma.done [#allocation2], 32
  %22 = sfence
  $region1: #{tpu_custom_call.1} parent=0
    #allocation5 [shape = 'u8[8192]{0}', space=vmem, size = 0x2000, scoped, tag = 'input window, operand 2']
    #allocation6 [shape = 's32[2]{0}', space=sflag, size = 0x8, scoped, tag = 'scoped memory for tpu_custom_call.1']
    #allocation7 [shape = 's32[2]{0}', space=sflag, size = 0x8, scoped, tag = 'scoped memory for tpu_custom_call.1']
    #allocation8 [shape = 'u8[8192]{0}', space=vmem, size = 0x2000, scoped, tag = 'input window, operand 3']
    #allocation9 [shape = 's32[2]{0}', space=sflag, size = 0x8, scoped, tag = 'scoped memory for tpu_custom_call.1']
    #allocation10 [shape = 'u8[32768]{0}', space=vmem, size = 0x8000, scoped, tag = 'input window, operand 4, single buffered']
    #allocation11 [shape = 'u8[32768]{0}', space=vmem, size = 0x8000, scoped, tag = 'input window, operand 6, single buffered']
    #allocation12 [shape = 's32[1]{0}', space=sflag, size = 0x4, scoped, tag = 'scoped memory for tpu_custom_call.1']
    #allocation13 [shape = 'u8[32768]{0}', space=vmem, size = 0x8000, scoped, tag = 'input window, operand 8, single buffered']
    #allocation14 [shape = 'u8[1024]{0}', space=vmem, size = 0x400, scoped, tag = 'output window, operand 0']
    %23 = vsyncpa [#allocation6], 0
    %s24 = scalar_lea.sflag [#allocation6], 1
    %25 = vsyncpa %s24, 0
    %26 = vsyncpa [#allocation9], 0
    %s27 = scalar_lea.sflag [#allocation9], 1
    %28 = vsyncpa %s27, 0
    %29 = vsyncpa [#allocation12], 0
    %30 = vsyncpa [#allocation7], 0
    %s31 = scalar_lea.sflag [#allocation7], 1
    %32 = vsyncpa %s31, 0
    loop: start=0, step=1, limit=4
    $region2: #{tpu_custom_call.1} parent=1 // loop_pre_header
      _
    $region3: #{tpu_custom_call.1} parent=1 // loop_header
      %s34 = sphi 0, %s38
      %p35 = scmp.ge.s32.totalorder %s34, 4
      %s44 = sphi 0, %s46
      %s47 = sphi 0, %s44
      %s48 = sphi 0, %s47
      %s64 = sphi 0, %s48
      %s70 = sphi 0, %s72
      %s73 = sphi 0, %s70
      %s74 = sphi 0, %s73
      %s90 = sphi 0, %s74
      %s94 = sphi 0, %s94
      %s96 = sphi 0, %s94
      %s97 = sphi 0, %s96
      %s111 = sphi 0, %s97
      %s115 = sphi 0, %s115
      %s117 = sphi 0, %s115
      %s118 = sphi 0, %s117
      %s132 = sphi 0, %s118
      %s136 = sphi 0, %s136
      %s138 = sphi 0, %s136
      %s139 = sphi 0, %s138
      %s153 = sphi 0, %s139
      %s157 = sphi 0, %s157
      %s159 = sphi 0, %s157
      %s160 = sphi 0, %s159
      %s174 = sphi 0, %s160
      %s178 = sphi 0, %s178
      %s180 = sphi 0, %s178
      %s181 = sphi 0, %s180
      %s195 = sphi 0, %s181
      %s199 = sphi 0, %s199
      %s201 = sphi 0, %s199
      %s202 = sphi 0, %s201
      %s216 = sphi 0, %s202
      %s222 = sphi 0, %s224
      %s225 = sphi 0, %s222
      %s226 = sphi 0, %s225
      %s242 = sphi 0, %s226
    $region4: #{tpu_custom_call.1} parent=1 // loop_header_branch
      %37 = sbr.rel (%p35) target = $region8
    $region5: #{tpu_custom_call.1} parent=1 // loop_body
      %s39 = ssub.s32 %s34, 1
      %s40 = ssub.s32 %s34, 2
      %s41 = sadd.s32 %s34, 1
      %s42 = ssub.s32 %s34, %s41
      %p43 = scmp.eq.s32.totalorder %s42, 0
      %s45 = sadd.s32 %s44, 1
      %s46 = scalar_select %p43, %s44, %s45
      %p49 = pneg %p43
      %p50 = scmp.eq.s32.totalorder %s34, 1
      %p51 = por %p49, %p50
      %p52 = scmp.ne.s32.totalorder %s44, %s47
      %p53 = scmp.eq.s32.totalorder %s34, 0
      %p54 = por %p52, %p53
      %p55 = scmp.ne.s32.totalorder %s44, %s47
      %p56 = scmp.eq.s32.totalorder %s39, 1
      %p57 = por %p55, %p56
      %p58 = scmp.ne.s32.totalorder %s47, %s48
      %p59 = scmp.eq.s32.totalorder %s39, 0
      %p60 = por %p58, %p59
      %p61 = scmp.ne.s32.totalorder %s47, %s48
      %p62 = scmp.eq.s32.totalorder %s40, 1
      %p63 = por %p61, %p62
      %p65 = scmp.ne.s32.totalorder %s48, %s64
      %p66 = scmp.eq.s32.totalorder %s40, 0
      %p67 = por %p65, %p66
      %s68 = ssub.s32 %s34, %s41
      %p69 = scmp.eq.s32.totalorder %s68, 0
      %s71 = sadd.s32 %s70, 1
      %s72 = scalar_select %p69, %s70, %s71
      %p75 = pneg %p69
      %p76 = scmp.eq.s32.totalorder %s34, 1
      %p77 = por %p75, %p76
      %p78 = scmp.ne.s32.totalorder %s70, %s73
      %p79 = scmp.eq.s32.totalorder %s34, 0
      %p80 = por %p78, %p79
      %p81 = scmp.ne.s32.totalorder %s70, %s73
      %p82 = scmp.eq.s32.totalorder %s39, 1
      %p83 = por %p81, %p82
      %p84 = scmp.ne.s32.totalorder %s73, %s74
      %p85 = scmp.eq.s32.totalorder %s39, 0
      %p86 = por %p84, %p85
      %p87 = scmp.ne.s32.totalorder %s73, %s74
      %p88 = scmp.eq.s32.totalorder %s40, 1
      %p89 = por %p87, %p88
      %p91 = scmp.ne.s32.totalorder %s74, %s90
      %p92 = scmp.eq.s32.totalorder %s40, 0
      %p93 = por %p91, %p92
      %s95 = sadd.s32 %s94, 1
      %p98 = scmp.eq.s32.totalorder %s34, 1
      %p99 = scmp.ne.s32.totalorder %s94, %s96
      %p100 = scmp.eq.s32.totalorder %s34, 0
      %p101 = por %p99, %p100
      %p102 = scmp.ne.s32.totalorder %s94, %s96
      %p103 = scmp.eq.s32.totalorder %s39, 1
      %p104 = por %p102, %p103
      %p105 = scmp.ne.s32.totalorder %s96, %s97
      %p106 = scmp.eq.s32.totalorder %s39, 0
      %p107 = por %p105, %p106
      %p108 = scmp.ne.s32.totalorder %s96, %s97
      %p109 = scmp.eq.s32.totalorder %s40, 1
      %p110 = por %p108, %p109
      %p112 = scmp.ne.s32.totalorder %s97, %s111
      %p113 = scmp.eq.s32.totalorder %s40, 0
      %p114 = por %p112, %p113
      %s116 = sadd.s32 %s115, 1
      %p119 = scmp.eq.s32.totalorder %s34, 1
      %p120 = scmp.ne.s32.totalorder %s115, %s117
      %p121 = scmp.eq.s32.totalorder %s34, 0
      %p122 = por %p120, %p121
      %p123 = scmp.ne.s32.totalorder %s115, %s117
      %p124 = scmp.eq.s32.totalorder %s39, 1
      %p125 = por %p123, %p124
      %p126 = scmp.ne.s32.totalorder %s117, %s118
      %p127 = scmp.eq.s32.totalorder %s39, 0
      %p128 = por %p126, %p127
      %p129 = scmp.ne.s32.totalorder %s117, %s118
      %p130 = scmp.eq.s32.totalorder %s40, 1
      %p131 = por %p129, %p130
      %p133 = scmp.ne.s32.totalorder %s118, %s132
      %p134 = scmp.eq.s32.totalorder %s40, 0
      %p135 = por %p133, %p134
      %s137 = sadd.s32 %s136, 1
      %p140 = scmp.eq.s32.totalorder %s34, 1
      %p141 = scmp.ne.s32.totalorder %s136, %s138
      %p142 = scmp.eq.s32.totalorder %s34, 0
      %p143 = por %p141, %p142
      %p144 = scmp.ne.s32.totalorder %s136, %s138
      %p145 = scmp.eq.s32.totalorder %s39, 1
      %p146 = por %p144, %p145
      %p147 = scmp.ne.s32.totalorder %s138, %s139
      %p148 = scmp.eq.s32.totalorder %s39, 0
      %p149 = por %p147, %p148
      %p150 = scmp.ne.s32.totalorder %s138, %s139
      %p151 = scmp.eq.s32.totalorder %s40, 1
      %p152 = por %p150, %p151
      %p154 = scmp.ne.s32.totalorder %s139, %s153
      %p155 = scmp.eq.s32.totalorder %s40, 0
      %p156 = por %p154, %p155
      %s158 = sadd.s32 %s157, 1
      %p161 = scmp.eq.s32.totalorder %s34, 1
      %p162 = scmp.ne.s32.totalorder %s157, %s159
      %p163 = scmp.eq.s32.totalorder %s34, 0
      %p164 = por %p162, %p163
      %p165 = scmp.ne.s32.totalorder %s157, %s159
      %p166 = scmp.eq.s32.totalorder %s39, 1
      %p167 = por %p165, %p166
      %p168 = scmp.ne.s32.totalorder %s159, %s160
      %p169 = scmp.eq.s32.totalorder %s39, 0
      %p170 = por %p168, %p169
      %p171 = scmp.ne.s32.totalorder %s159, %s160
      %p172 = scmp.eq.s32.totalorder %s40, 1
      %p173 = por %p171, %p172
      %p175 = scmp.ne.s32.totalorder %s160, %s174
      %p176 = scmp.eq.s32.totalorder %s40, 0
      %p177 = por %p175, %p176
      %s179 = sadd.s32 %s178, 1
      %p182 = scmp.eq.s32.totalorder %s34, 1
      %p183 = scmp.ne.s32.totalorder %s178, %s180
      %p184 = scmp.eq.s32.totalorder %s34, 0
      %p185 = por %p183, %p184
      %p186 = scmp.ne.s32.totalorder %s178, %s180
      %p187 = scmp.eq.s32.totalorder %s39, 1
      %p188 = por %p186, %p187
      %p189 = scmp.ne.s32.totalorder %s180, %s181
      %p190 = scmp.eq.s32.totalorder %s39, 0
      %p191 = por %p189, %p190
      %p192 = scmp.ne.s32.totalorder %s180, %s181
      %p193 = scmp.eq.s32.totalorder %s40, 1
      %p194 = por %p192, %p193
      %p196 = scmp.ne.s32.totalorder %s181, %s195
      %p197 = scmp.eq.s32.totalorder %s40, 0
      %p198 = por %p196, %p197
      %s200 = sadd.s32 %s199, 1
      %p203 = scmp.eq.s32.totalorder %s34, 1
      %p204 = scmp.ne.s32.totalorder %s199, %s201
      %p205 = scmp.eq.s32.totalorder %s34, 0
      %p206 = por %p204, %p205
      %p207 = scmp.ne.s32.totalorder %s199, %s201
      %p208 = scmp.eq.s32.totalorder %s39, 1
      %p209 = por %p207, %p208
      %p210 = scmp.ne.s32.totalorder %s201, %s202
      %p211 = scmp.eq.s32.totalorder %s39, 0
      %p212 = por %p210, %p211
      %p213 = scmp.ne.s32.totalorder %s201, %s202
      %p214 = scmp.eq.s32.totalorder %s40, 1
      %p215 = por %p213, %p214
      %p217 = scmp.ne.s32.totalorder %s202, %s216
      %p218 = scmp.eq.s32.totalorder %s40, 0
      %p219 = por %p217, %p218
      %s220 = ssub.s32 %s34, %s41
      %p221 = scmp.eq.s32.totalorder %s220, 0
      %s223 = sadd.s32 %s222, 1
      %s224 = scalar_select %p221, %s222, %s223
      %p227 = pneg %p221
      %p228 = scmp.eq.s32.totalorder %s34, 1
      %p229 = por %p227, %p228
      %p230 = scmp.ne.s32.totalorder %s222, %s225
      %p231 = scmp.eq.s32.totalorder %s34, 0
      %p232 = por %p230, %p231
      %p233 = scmp.ne.s32.totalorder %s222, %s225
      %p234 = scmp.eq.s32.totalorder %s39, 1
      %p235 = por %p233, %p234
      %p236 = scmp.ne.s32.totalorder %s225, %s226
      %p237 = scmp.eq.s32.totalorder %s39, 0
      %p238 = por %p236, %p237
      %p239 = scmp.ne.s32.totalorder %s225, %s226
      %p240 = scmp.eq.s32.totalorder %s40, 1
      %p241 = por %p239, %p240
      %p243 = scmp.ne.s32.totalorder %s226, %s242
      %p244 = scmp.eq.s32.totalorder %s40, 0
      %p245 = por %p243, %p244
      %p246 = scmp.le.s32.totalorder 1, %s34
      %p247 = scmp.lt.s32.totalorder %s34, 3
      %p248 = pnand %p246, %p247
      %p249 = pneg %p248
      // Predicated region
      $region9: #{tpu_custom_call.1} parent=5 // pred_check
        _
      $region10: #{tpu_custom_call.1} parent=5 // pred_check_branch
        %251 = sbr.rel (%p248) target = $region12
      $region11: #{tpu_custom_call.1} parent=5 // pred_region
        %s252 = ssub.s32 %s34, 1
        // Predicated region
        $region13: #{tpu_custom_call.1} parent=11 // pred_check
          %p253 = pneg %p107
        $region14: #{tpu_custom_call.1} parent=11 // pred_check_branch
          %255 = sbr.rel (%p253) target = $region16
        $region15: #{tpu_custom_call.1} parent=11 // pred_region
          %s257 = ssub.s32 1024, 1024
          %258 = vsyncadd [#allocation9], %s257
          %s259 = sshll.u32 [#allocation10], 4
          %s260 = int_to_ptr.vmem [resolvable:$true] %s259
          %265 = dma.hbm_to_vmem [thread:$0]  %s4, 1024, %s260, [#allocation9], 64, 64, 4
        $region16: #{tpu_custom_call.1} parent=11 // pred_fallthru
          _
        // Predicated region
        $region17: #{tpu_custom_call.1} parent=11 // pred_check
          %p266 = pneg %p128
        $region18: #{tpu_custom_call.1} parent=11 // pred_check_branch
          %268 = sbr.rel (%p266) target = $region20
        $region19: #{tpu_custom_call.1} parent=11 // pred_region
          _
        $region20: #{tpu_custom_call.1} parent=11 // pred_fallthru
          _
        // Predicated region
        $region21: #{tpu_custom_call.1} parent=11 // pred_check
          %p269 = pneg %p149
        $region22: #{tpu_custom_call.1} parent=11 // pred_check_branch
          %271 = sbr.rel (%p269) target = $region24
        $region23: #{tpu_custom_call.1} parent=11 // pred_region
          %s273 = ssub.s32 1024, 1024
          %274 = vsyncadd [#allocation12], %s273
          %s275 = sshll.u32 [#allocation11], 4
          %s276 = int_to_ptr.vmem [resolvable:$true] %s275
          %281 = dma.hbm_to_vmem [thread:$0]  %s6, 1024, %s276, [#allocation12], 64, 64, 4
        $region24: #{tpu_custom_call.1} parent=11 // pred_fallthru
          _
        // Predicated region
        $region25: #{tpu_custom_call.1} parent=11 // pred_check
          %p282 = pneg %p170
        $region26: #{tpu_custom_call.1} parent=11 // pred_check_branch
          %284 = sbr.rel (%p282) target = $region28
        $region27: #{tpu_custom_call.1} parent=11 // pred_region
          _
        $region28: #{tpu_custom_call.1} parent=11 // pred_fallthru
          _
        // Predicated region
        $region29: #{tpu_custom_call.1} parent=11 // pred_check
          %p285 = pneg %p191
        $region30: #{tpu_custom_call.1} parent=11 // pred_check_branch
          %287 = sbr.rel (%p285) target = $region32
        $region31: #{tpu_custom_call.1} parent=11 // pred_region
          %s289 = ssub.s32 1024, 1024
          %290 = vsyncadd [#allocation12], %s289
          %s291 = sshll.u32 [#allocation13], 4
          %s292 = int_to_ptr.vmem [resolvable:$true] %s291
          %297 = dma.hbm_to_vmem [thread:$0]  %s8, 1024, %s292, [#allocation12], 64, 64, 4
        $region32: #{tpu_custom_call.1} parent=11 // pred_fallthru
          _
        // Predicated region
        $region33: #{tpu_custom_call.1} parent=11 // pred_check
          %p298 = pneg %p212
        $region34: #{tpu_custom_call.1} parent=11 // pred_check_branch
          %300 = sbr.rel (%p298) target = $region36
        $region35: #{tpu_custom_call.1} parent=11 // pred_region
          _
        $region36: #{tpu_custom_call.1} parent=11 // pred_fallthru
          _
      $region12: #{tpu_custom_call.1} parent=5 // pred_fallthru
        _
      %p301 = scmp.lt.s32.totalorder %s34, 2
      // Predicated region
      $region37: #{tpu_custom_call.1} parent=5 // pred_check
        %p302 = pneg %p301
      $region38: #{tpu_custom_call.1} parent=5 // pred_check_branch
        %304 = sbr.rel (%p302) target = $region40
      $region39: #{tpu_custom_call.1} parent=5 // pred_region
        // Predicated region
        $region41: #{tpu_custom_call.1} parent=39 // pred_check
          %p305 = pneg %p54
        $region42: #{tpu_custom_call.1} parent=39 // pred_check_branch
          %307 = sbr.rel (%p305) target = $region44
        $region43: #{tpu_custom_call.1} parent=39 // pred_region
          %s308 = sand.u32 %s44, 1
          %s309 = scalar_lea.sflag [#allocation6], %s308
          %s310 = sand.u32 %s44, 1
          %s311 = smul.addr %s310, 8
          %s312 = scalar_lea.vmem [#allocation5], %s311
          %s314 = ssub.s32 128, 128
          %315 = vsyncadd %s309, %s314
          %s316 = smul.addr %s34, 2
          %s317 = smul.addr %s316, 64
          %s318 = scalar_lea.hbm %s2, %s317
          %s319 = sshll.u32 %s312, 4
          %s320 = int_to_ptr.vmem [resolvable:$true] %s319
          %325 = dma.hbm_to_vmem [thread:$0]  %s318, 128, %s320, %s309, 64, 64, 4
        $region44: #{tpu_custom_call.1} parent=39 // pred_fallthru
          _
        // Predicated region
        $region45: #{tpu_custom_call.1} parent=39 // pred_check
          %p326 = pneg %p80
        $region46: #{tpu_custom_call.1} parent=39 // pred_check_branch
          %328 = sbr.rel (%p326) target = $region48
        $region47: #{tpu_custom_call.1} parent=39 // pred_region
          %s329 = sand.u32 %s34, 1
          %s330 = scalar_lea.sflag [#allocation9], %s329
          %s331 = sand.u32 %s70, 1
          %s332 = smul.addr %s331, 8
          %s333 = scalar_lea.vmem [#allocation8], %s332
          %s335 = ssub.s32 128, 128
          %336 = vsyncadd %s330, %s335
          %s337 = smul.addr %s34, 2
          %s338 = smul.addr %s337, 64
          %s339 = scalar_lea.hbm %s3, %s338
          %s340 = sshll.u32 %s333, 4
          %s341 = int_to_ptr.vmem [resolvable:$true] %s340
          %346 = dma.hbm_to_vmem [thread:$0]  %s339, 128, %s341, %s330, 64, 64, 4
        $region48: #{tpu_custom_call.1} parent=39 // pred_fallthru
          _
      $region40: #{tpu_custom_call.1} parent=5 // pred_fallthru
        _
      %p347 = scmp.le.s32.totalorder 1, %s34
      %p348 = scmp.lt.s32.totalorder %s34, 3
      %p349 = pnand %p347, %p348
      %p350 = pneg %p349
      // Predicated region
      $region49: #{tpu_custom_call.1} parent=5 // pred_check
        _
      $region50: #{tpu_custom_call.1} parent=5 // pred_check_branch
        %352 = sbr.rel (%p349) target = $region52
      $region51: #{tpu_custom_call.1} parent=5 // pred_region
        %s353 = ssub.s32 %s34, 1
        %s354 = sand.u32 %s47, 1
        %s355 = scalar_lea.sflag [#allocation6], %s354
        %s356 = sand.u32 %s47, 1
        %s357 = smul.addr %s356, 8
        %s358 = scalar_lea.vmem [#allocation5], %s357
        // Predicated region
        $region53: #{tpu_custom_call.1} parent=51 // pred_check
          %p359 = pneg %p60
        $region54: #{tpu_custom_call.1} parent=51 // pred_check_branch
          %361 = sbr.rel (%p359) target = $region56
        $region55: #{tpu_custom_call.1} parent=51 // pred_region
          %362 = dma.done %s355, 128
        $region56: #{tpu_custom_call.1} parent=51 // pred_fallthru
          _
        %s363 = sand.u32 %s39, 1
        %s364 = scalar_lea.sflag [#allocation9], %s363
        %s365 = sand.u32 %s73, 1
        %s366 = smul.addr %s365, 8
        %s367 = scalar_lea.vmem [#allocation8], %s366
        // Predicated region
        $region57: #{tpu_custom_call.1} parent=51 // pred_check
          %p368 = pneg %p86
        $region58: #{tpu_custom_call.1} parent=51 // pred_check_branch
          %370 = sbr.rel (%p368) target = $region60
        $region59: #{tpu_custom_call.1} parent=51 // pred_region
          %371 = dma.done %s364, 128
        $region60: #{tpu_custom_call.1} parent=51 // pred_fallthru
          _
        // Predicated region
        $region61: #{tpu_custom_call.1} parent=51 // pred_check
          %p372 = pneg %p107
        $region62: #{tpu_custom_call.1} parent=51 // pred_check_branch
          %374 = sbr.rel (%p372) target = $region64
        $region63: #{tpu_custom_call.1} parent=51 // pred_region
          %375 = dma.done [#allocation9], 1024
        $region64: #{tpu_custom_call.1} parent=51 // pred_fallthru
          _
        // Predicated region
        $region65: #{tpu_custom_call.1} parent=51 // pred_check
          %p376 = pneg %p149
        $region66: #{tpu_custom_call.1} parent=51 // pred_check_branch
          %378 = sbr.rel (%p376) target = $region68
        $region67: #{tpu_custom_call.1} parent=51 // pred_region
          %379 = dma.done [#allocation12], 1024
        $region68: #{tpu_custom_call.1} parent=51 // pred_fallthru
          _
        // Predicated region
        $region69: #{tpu_custom_call.1} parent=51 // pred_check
          %p380 = pneg %p191
        $region70: #{tpu_custom_call.1} parent=51 // pred_check_branch
          %382 = sbr.rel (%p380) target = $region72
        $region71: #{tpu_custom_call.1} parent=51 // pred_region
          %383 = dma.done [#allocation12], 1024
        $region72: #{tpu_custom_call.1} parent=51 // pred_fallthru
          _
        %s384 = sand.u32 %s47, 1
        %s385 = scalar_lea.sflag [#allocation6], %s384
        %s386 = sand.u32 %s47, 1
        %s387 = smul.addr %s386, 8
        %s388 = scalar_lea.vmem [#allocation5], %s387
        %p389 = pneg %p60
        %p390 = pneg %p57
        %s391 = sand.u32 %s39, 1
        %s392 = scalar_lea.sflag [#allocation9], %s391
        %s393 = sand.u32 %s73, 1
        %s394 = smul.addr %s393, 8
        %s395 = scalar_lea.vmem [#allocation8], %s394
        %p396 = pneg %p86
        %p397 = pneg %p83
        %p398 = pneg %p107
        %p399 = pneg %p104
        %p400 = pneg %p128
        %p401 = pneg %p125
        %p402 = pneg %p149
        %p403 = pneg %p146
        %p404 = pneg %p170
        %p405 = pneg %p167
        %p406 = pneg %p191
        %p407 = pneg %p188
        %p408 = pneg %p212
        %p409 = pneg %p209
        %p410 = pneg %p238
        %p411 = pneg %p235
        %s412 = sand.u32 %s225, 1
        %s413 = scalar_lea.sflag [#allocation7], %s412
        %s414 = sand.u32 %s225, 1
        %s415 = scalar_lea.vmem [#allocation14], %s414
        %v417 = vld [vmem:[%s358] sm:$0xf]
        %v418 = vld [vmem:[%s358 + $0x4] sm:$0xf]
        %v419 = vld [vmem:[#allocation10] sm:$0xf]
        %v420 = vld [vmem:[#allocation10 + $0x4] sm:$0xf]
        %v421 = vld [vmem:[#allocation10 + $0x8] sm:$0xf]
        %v422 = vld [vmem:[#allocation10 + $0xc] sm:$0xf]
        %v423 = vld [vmem:[#allocation10 + $0x10] sm:$0xf]
        %v424 = vld [vmem:[#allocation10 + $0x14] sm:$0xf]
        %v425 = vld [vmem:[#allocation10 + $0x18] sm:$0xf]
        %v426 = vld [vmem:[#allocation10 + $0x1c] sm:$0xf]
        %v427 = vld [vmem:[#allocation10 + $0x20] sm:$0xf]
        %v428 = vld [vmem:[#allocation10 + $0x24] sm:$0xf]
        %v429 = vld [vmem:[#allocation10 + $0x28] sm:$0xf]
        %v430 = vld [vmem:[#allocation10 + $0x2c] sm:$0xf]
        %v431 = vld [vmem:[#allocation10 + $0x30] sm:$0xf]
        %v432 = vld [vmem:[#allocation10 + $0x34] sm:$0xf]
        %v433 = vld [vmem:[#allocation10 + $0x38] sm:$0xf]
        %v434 = vld [vmem:[#allocation10 + $0x3c] sm:$0xf]
        %v435 = vld [vmem:[%s5] sm:$0x1]
        %v437 = vlaneseq
        %v438 = vshrl.u32 %v437, 7
        %v439 = vsub.s32 0, %v438
        %v440 = vrot.slane %v435, %v439
        %v444 = vunpack.c.l.b16 %v417
        %v445 = vunpack.c.l.b16 %v418
        %v446 = vpack.c.b16 %v445, %v444
        %v464 = vunpack.c.l.b16 %v419
        %v465 = vunpack.c.l.b16 %v420
        %v466 = vunpack.c.l.b16 %v421
        %v467 = vunpack.c.l.b16 %v422
        %v468 = vunpack.c.l.b16 %v423
        %v469 = vunpack.c.l.b16 %v424
        %v470 = vunpack.c.l.b16 %v425
        %v471 = vunpack.c.l.b16 %v426
        %v472 = vunpack.c.l.b16 %v427
        %v473 = vunpack.c.l.b16 %v428
        %v474 = vunpack.c.l.b16 %v429
        %v475 = vunpack.c.l.b16 %v430
        %v476 = vunpack.c.l.b16 %v431
        %v477 = vunpack.c.l.b16 %v432
        %v478 = vunpack.c.l.b16 %v433
        %v479 = vunpack.c.l.b16 %v434
        %v480 = vpack.c.b16 %v465, %v464
        %v481 = vpack.c.b16 %v467, %v466
        %v482 = vpack.c.b16 %v469, %v468
        %v483 = vpack.c.b16 %v471, %v470
        %v484 = vpack.c.b16 %v473, %v472
        %v485 = vpack.c.b16 %v475, %v474
        %v486 = vpack.c.b16 %v477, %v476
        %v487 = vpack.c.b16 %v479, %v478
        %496 = vmatprep.subr.bf16.mxu0 0
        %497 = vmatpush1.bf16.msra.mxu0 %v480
        %498 = vmatprep.subr.bf16.mxu0 0
        %499 = vmatpush1.bf16.msra.mxu0 %v481
        %500 = vmatprep.subr.bf16.mxu0 0
        %501 = vmatpush1.bf16.msra.mxu0 %v482
        %502 = vmatprep.subr.bf16.mxu0 0
        %503 = vmatpush1.bf16.msra.mxu0 %v483
        %504 = vmatprep.subr.bf16.mxu0 0
        %505 = vmatpush1.bf16.msra.mxu0 %v484
        %506 = vmatprep.subr.bf16.mxu0 0
        %507 = vmatpush1.bf16.msra.mxu0 %v485
        %508 = vmatprep.subr.bf16.mxu0 0
        %509 = vmatpush1.bf16.msra.mxu0 %v486
        %510 = vmatprep.subr.bf16.mxu0 0
        %511 = vmatpush1.bf16.msra.mxu0 %v487
        %512 = vmatprep.subr.bf16.mxu0 0
        %513 = vmatpush1.bf16.msra.mxu0 0
        %514 = vmatprep.subr.bf16.mxu0 0
        %515 = vmatpush1.bf16.msra.mxu0 0
        %516 = vmatprep.subr.bf16.mxu0 0
        %517 = vmatpush1.bf16.msra.mxu0 0
        %518 = vmatprep.subr.bf16.mxu0 0
        %519 = vmatpush1.bf16.msra.mxu0 0
        %520 = vmatprep.subr.bf16.mxu0 0
        %521 = vmatpush1.bf16.msra.mxu0 0
        %522 = vmatprep.subr.bf16.mxu0 0
        %523 = vmatpush1.bf16.msra.mxu0 0
        %524 = vmatprep.subr.bf16.mxu0 0
        %525 = vmatpush1.bf16.msra.mxu0 0
        %526 = vmatprep.subr.bf16.mxu0 0
        %527 = vmatpush1.bf16.msra.mxu0 0
        %528 = vmatprep.mubr.bf16.mxu0 0
        %529 = vmatmul.mubr.bf16.gmra.mrb[0].mxu0 %v446
        %v530 = vpop.f32.mrb[0].mxu0
        %v531 = vadd.f32 %v440, %v530
        %v532 = vpop.f32.mrb[0].mxu0
        %v533 = vpop.f32.mrb[0].mxu0
        %v534 = vadd.f32 %v440, %v533
        %v535 = vpop.f32.mrb[0].mxu0
        %536 = vdwg.mxu0
        %v537 = vmax.f32 %v531, 0.0
        %v538 = vmax.f32 %v534, 0.0
        %v539 = vld [vmem:[%s367] sm:$0xf]
        %v540 = vld [vmem:[%s367 + $0x4] sm:$0xf]
        %v541 = vld [vmem:[#allocation11] sm:$0xf]
        %v542 = vld [vmem:[#allocation11 + $0x4] sm:$0xf]
        %v543 = vld [vmem:[#allocation11 + $0x8] sm:$0xf]
        %v544 = vld [vmem:[#allocation11 + $0xc] sm:$0xf]
        %v545 = vld [vmem:[#allocation11 + $0x10] sm:$0xf]
        %v546 = vld [vmem:[#allocation11 + $0x14] sm:$0xf]
        %v547 = vld [vmem:[#allocation11 + $0x18] sm:$0xf]
        %v548 = vld [vmem:[#allocation11 + $0x1c] sm:$0xf]
        %v549 = vld [vmem:[#allocation11 + $0x20] sm:$0xf]
        %v550 = vld [vmem:[#allocation11 + $0x24] sm:$0xf]
        %v551 = vld [vmem:[#allocation11 + $0x28] sm:$0xf]
        %v552 = vld [vmem:[#allocation11 + $0x2c] sm:$0xf]
        %v553 = vld [vmem:[#allocation11 + $0x30] sm:$0xf]
        %v554 = vld [vmem:[#allocation11 + $0x34] sm:$0xf]
        %v555 = vld [vmem:[#allocation11 + $0x38] sm:$0xf]
        %v556 = vld [vmem:[#allocation11 + $0x3c] sm:$0xf]
        %v557 = vld [vmem:[%s7] sm:$0x1]
        %v559 = vlaneseq
        %v560 = vshrl.u32 %v559, 7
        %v561 = vsub.s32 0, %v560
        %v562 = vrot.slane %v557, %v561
        %v566 = vunpack.c.l.b16 %v539
        %v567 = vunpack.c.l.b16 %v540
        %v568 = vpack.c.b16 %v567, %v566
        %v586 = vunpack.c.l.b16 %v541
        %v587 = vunpack.c.l.b16 %v542
        %v588 = vunpack.c.l.b16 %v543
        %v589 = vunpack.c.l.b16 %v544
        %v590 = vunpack.c.l.b16 %v545
        %v591 = vunpack.c.l.b16 %v546
        %v592 = vunpack.c.l.b16 %v547
        %v593 = vunpack.c.l.b16 %v548
        %v594 = vunpack.c.l.b16 %v549
        %v595 = vunpack.c.l.b16 %v550
        %v596 = vunpack.c.l.b16 %v551
        %v597 = vunpack.c.l.b16 %v552
        %v598 = vunpack.c.l.b16 %v553
        %v599 = vunpack.c.l.b16 %v554
        %v600 = vunpack.c.l.b16 %v555
        %v601 = vunpack.c.l.b16 %v556
        %v602 = vpack.c.b16 %v587, %v586
        %v603 = vpack.c.b16 %v589, %v588
        %v604 = vpack.c.b16 %v591, %v590
        %v605 = vpack.c.b16 %v593, %v592
        %v606 = vpack.c.b16 %v595, %v594
        %v607 = vpack.c.b16 %v597, %v596
        %v608 = vpack.c.b16 %v599, %v598
        %v609 = vpack.c.b16 %v601, %v600
        %618 = vmatprep.subr.bf16.mxu0 0
        %619 = vmatpush1.bf16.msra.mxu0 %v602
        %620 = vmatprep.subr.bf16.mxu0 0
        %621 = vmatpush1.bf16.msra.mxu0 %v603
        %622 = vmatprep.subr.bf16.mxu0 0
        %623 = vmatpush1.bf16.msra.mxu0 %v604
        %624 = vmatprep.subr.bf16.mxu0 0
        %625 = vmatpush1.bf16.msra.mxu0 %v605
        %626 = vmatprep.subr.bf16.mxu0 0
        %627 = vmatpush1.bf16.msra.mxu0 %v606
        %628 = vmatprep.subr.bf16.mxu0 0
        %629 = vmatpush1.bf16.msra.mxu0 %v607
        %630 = vmatprep.subr.bf16.mxu0 0
        %631 = vmatpush1.bf16.msra.mxu0 %v608
        %632 = vmatprep.subr.bf16.mxu0 0
        %633 = vmatpush1.bf16.msra.mxu0 %v609
        %634 = vmatprep.subr.bf16.mxu0 0
        %635 = vmatpush1.bf16.msra.mxu0 0
        %636 = vmatprep.subr.bf16.mxu0 0
        %637 = vmatpush1.bf16.msra.mxu0 0
        %638 = vmatprep.subr.bf16.mxu0 0
        %639 = vmatpush1.bf16.msra.mxu0 0
        %640 = vmatprep.subr.bf16.mxu0 0
        %641 = vmatpush1.bf16.msra.mxu0 0
        %642 = vmatprep.subr.bf16.mxu0 0
        %643 = vmatpush1.bf16.msra.mxu0 0
        %644 = vmatprep.subr.bf16.mxu0 0
        %645 = vmatpush1.bf16.msra.mxu0 0
        %646 = vmatprep.subr.bf16.mxu0 0
        %647 = vmatpush1.bf16.msra.mxu0 0
        %648 = vmatprep.subr.bf16.mxu0 0
        %649 = vmatpush1.bf16.msra.mxu0 0
        %650 = vmatprep.mubr.bf16.mxu0 0
        %651 = vmatmul.mubr.bf16.gmra.mrb[0].mxu0 %v568
        %v652 = vpop.f32.mrb[0].mxu0
        %v653 = vadd.f32 %v562, %v652
        %v654 = vpop.f32.mrb[0].mxu0
        %v655 = vpop.f32.mrb[0].mxu0
        %v656 = vadd.f32 %v562, %v655
        %v657 = vpop.f32.mrb[0].mxu0
        %658 = vdwg.mxu0
        %v659 = vmax.f32 %v653, 0.0
        %v660 = vmax.f32 %v656, 0.0
        %v661 = vpack.c.bf16 %v538, %v537
        %v662 = vld [vmem:[#allocation13] sm:$0xf]
        %v663 = vld [vmem:[#allocation13 + $0x4] sm:$0xf]
        %v664 = vld [vmem:[#allocation13 + $0x8] sm:$0xf]
        %v665 = vld [vmem:[#allocation13 + $0xc] sm:$0xf]
        %v666 = vld [vmem:[#allocation13 + $0x10] sm:$0xf]
        %v667 = vld [vmem:[#allocation13 + $0x14] sm:$0xf]
        %v668 = vld [vmem:[#allocation13 + $0x18] sm:$0xf]
        %v669 = vld [vmem:[#allocation13 + $0x1c] sm:$0xf]
        %v670 = vld [vmem:[#allocation13 + $0x20] sm:$0xf]
        %v671 = vld [vmem:[#allocation13 + $0x24] sm:$0xf]
        %v672 = vld [vmem:[#allocation13 + $0x28] sm:$0xf]
        %v673 = vld [vmem:[#allocation13 + $0x2c] sm:$0xf]
        %v674 = vld [vmem:[#allocation13 + $0x30] sm:$0xf]
        %v675 = vld [vmem:[#allocation13 + $0x34] sm:$0xf]
        %v676 = vld [vmem:[#allocation13 + $0x38] sm:$0xf]
        %v677 = vld [vmem:[#allocation13 + $0x3c] sm:$0xf]
        %v678 = vld [vmem:[%s9] sm:$0x1]
        %v680 = vlaneseq
        %v681 = vshrl.u32 %v680, 7
        %v682 = vsub.s32 0, %v681
        %v683 = vrot.slane %v678, %v682
        %v701 = vunpack.c.l.b16 %v662
        %v702 = vunpack.c.l.b16 %v663
        %v703 = vunpack.c.l.b16 %v664
        %v704 = vunpack.c.l.b16 %v665
        %v705 = vunpack.c.l.b16 %v666
        %v706 = vunpack.c.l.b16 %v667
        %v707 = vunpack.c.l.b16 %v668
        %v708 = vunpack.c.l.b16 %v669
        %v709 = vunpack.c.l.b16 %v670
        %v710 = vunpack.c.l.b16 %v671
        %v711 = vunpack.c.l.b16 %v672
        %v712 = vunpack.c.l.b16 %v673
        %v713 = vunpack.c.l.b16 %v674
        %v714 = vunpack.c.l.b16 %v675
        %v715 = vunpack.c.l.b16 %v676
        %v716 = vunpack.c.l.b16 %v677
        %v717 = vpack.c.b16 %v702, %v701
        %v718 = vpack.c.b16 %v704, %v703
        %v719 = vpack.c.b16 %v706, %v705
        %v720 = vpack.c.b16 %v708, %v707
        %v721 = vpack.c.b16 %v710, %v709
        %v722 = vpack.c.b16 %v712, %v711
        %v723 = vpack.c.b16 %v714, %v713
        %v724 = vpack.c.b16 %v716, %v715
        %733 = vmatprep.subr.bf16.mxu0 0
        %734 = vmatpush1.bf16.msra.mxu0 %v717
        %735 = vmatprep.subr.bf16.mxu0 0
        %736 = vmatpush1.bf16.msra.mxu0 %v718
        %737 = vmatprep.subr.bf16.mxu0 0
        %738 = vmatpush1.bf16.msra.mxu0 %v719
        %739 = vmatprep.subr.bf16.mxu0 0
        %740 = vmatpush1.bf16.msra.mxu0 %v720
        %741 = vmatprep.subr.bf16.mxu0 0
        %742 = vmatpush1.bf16.msra.mxu0 %v721
        %743 = vmatprep.subr.bf16.mxu0 0
        %744 = vmatpush1.bf16.msra.mxu0 %v722
        %745 = vmatprep.subr.bf16.mxu0 0
        %746 = vmatpush1.bf16.msra.mxu0 %v723
        %747 = vmatprep.subr.bf16.mxu0 0
        %748 = vmatpush1.bf16.msra.mxu0 %v724
        %749 = vmatprep.subr.bf16.mxu0 0
        %750 = vmatpush1.bf16.msra.mxu0 0
        %751 = vmatprep.subr.bf16.mxu0 0
        %752 = vmatpush1.bf16.msra.mxu0 0
        %753 = vmatprep.subr.bf16.mxu0 0
        %754 = vmatpush1.bf16.msra.mxu0 0
        %755 = vmatprep.subr.bf16.mxu0 0
        %756 = vmatpush1.bf16.msra.mxu0 0
        %757 = vmatprep.subr.bf16.mxu0 0
        %758 = vmatpush1.bf16.msra.mxu0 0
        %759 = vmatprep.subr.bf16.mxu0 0
        %760 = vmatpush1.bf16.msra.mxu0 0
        %761 = vmatprep.subr.bf16.mxu0 0
        %762 = vmatpush1.bf16.msra.mxu0 0
        %763 = vmatprep.subr.bf16.mxu0 0
        %764 = vmatpush1.bf16.msra.mxu0 0
        %765 = vmatprep.mubr.bf16.mxu0 0
        %766 = vmatmul.mubr.bf16.gmra.mrb[0].mxu0 %v661
        %v767 = vpop.f32.mrb[0].mxu0
        %v768 = vadd.f32 %v683, %v767
        %v769 = vpop.f32.mrb[0].mxu0
        %v770 = vpop.f32.mrb[0].mxu0
        %v771 = vadd.f32 %v683, %v770
        %v772 = vpop.f32.mrb[0].mxu0
        %773 = vdwg.mxu0
        %v774 = vmax.f32 %v768, 0.0
        %v775 = vmax.f32 %v771, 0.0
        %v776 = vpack.c.bf16 %v660, %v659
        %777 = vmatprep.subr.bf16.mxu0 0
        %778 = vmatpush1.bf16.msra.mxu0 %v717
        %779 = vmatprep.subr.bf16.mxu0 0
        %780 = vmatpush1.bf16.msra.mxu0 %v718
        %781 = vmatprep.subr.bf16.mxu0 0
        %782 = vmatpush1.bf16.msra.mxu0 %v719
        %783 = vmatprep.subr.bf16.mxu0 0
        %784 = vmatpush1.bf16.msra.mxu0 %v720
        %785 = vmatprep.subr.bf16.mxu0 0
        %786 = vmatpush1.bf16.msra.mxu0 %v721
        %787 = vmatprep.subr.bf16.mxu0 0
        %788 = vmatpush1.bf16.msra.mxu0 %v722
        %789 = vmatprep.subr.bf16.mxu0 0
        %790 = vmatpush1.bf16.msra.mxu0 %v723
        %791 = vmatprep.subr.bf16.mxu0 0
        %792 = vmatpush1.bf16.msra.mxu0 %v724
        %793 = vmatprep.subr.bf16.mxu0 0
        %794 = vmatpush1.bf16.msra.mxu0 0
        %795 = vmatprep.subr.bf16.mxu0 0
        %796 = vmatpush1.bf16.msra.mxu0 0
        %797 = vmatprep.subr.bf16.mxu0 0
        %798 = vmatpush1.bf16.msra.mxu0 0
        %799 = vmatprep.subr.bf16.mxu0 0
        %800 = vmatpush1.bf16.msra.mxu0 0
        %801 = vmatprep.subr.bf16.mxu0 0
        %802 = vmatpush1.bf16.msra.mxu0 0
        %803 = vmatprep.subr.bf16.mxu0 0
        %804 = vmatpush1.bf16.msra.mxu0 0
        %805 = vmatprep.subr.bf16.mxu0 0
        %806 = vmatpush1.bf16.msra.mxu0 0
        %807 = vmatprep.subr.bf16.mxu0 0
        %808 = vmatpush1.bf16.msra.mxu0 0
        %809 = vmatprep.mubr.bf16.mxu0 0
        %810 = vmatmul.mubr.bf16.gmra.mrb[0].mxu0 %v776
        %v811 = vpop.f32.mrb[0].mxu0
        %v812 = vadd.f32 %v683, %v811
        %v813 = vpop.f32.mrb[0].mxu0
        %v814 = vpop.f32.mrb[0].mxu0
        %v815 = vadd.f32 %v683, %v814
        %v816 = vpop.f32.mrb[0].mxu0
        %817 = vdwg.mxu0
        %v818 = vmax.f32 %v812, 0.0
        %v819 = vmax.f32 %v815, 0.0
        %s820 = sld [smem:[#allocation3 + %s39]]
        %s821 = sld [smem:[#allocation4 + %s39]]
        %v822 = vlaneseq
        %v823 = vshrl.u32 %v822, 7
        %v824 = vadd.s32 %v823, 8
        %v825 = vstv %s820
        %vm826 = vcmp.lt.s32.totalorder %v823, %v825
        %vm827 = vcmp.lt.s32.totalorder %v824, %v825
        %v828 = vstv %s821
        %vm829 = vcmp.lt.s32.totalorder %v823, %v828
        %vm830 = vcmp.lt.s32.totalorder %v824, %v828
        %v831 = vsel %vm826, 1, 0
        %v832 = vsel %vm827, 1, 0
        %v833 = vcvt.s32.f32 %v831
        %v834 = vcvt.s32.f32 %v832
        %v835 = vmul.f32 %v774, %v833
        %v836 = vmul.f32 %v775, %v834
        %v837 = vadd.f32 %v835, %v836
        %v838 = vrot.slane %v837, 4
        %v839 = vadd.f32 %v837, %v838
        %v840 = vrot.slane %v839, 2
        %v841 = vadd.f32 %v839, %v840
        %v842 = vrot.slane %v841, 1
        %v843 = vadd.f32 %v841, %v842
        %v844 = vsel %vm829, 1, 0
        %v845 = vsel %vm830, 1, 0
        %v846 = vcvt.s32.f32 %v844
        %v847 = vcvt.s32.f32 %v845
        %v848 = vmul.f32 %v818, %v846
        %v849 = vmul.f32 %v819, %v847
        %v850 = vadd.f32 %v848, %v849
        %v851 = vrot.slane %v850, 4
        %v852 = vadd.f32 %v850, %v851
        %v853 = vrot.slane %v852, 2
        %v854 = vadd.f32 %v852, %v853
        %v855 = vrot.slane %v854, 1
        %v856 = vadd.f32 %v854, %v855
        %v857 = vadd.f32 %v843, %v856
        %s858 = sadd.s32 %s820, %s821
        %s859 = scvt.s32.f32 %s858
        %s860 = smax.f32 %s859, 1.0
        %v861 = vstv %s860
        %v862 = vrcp.pop %v861
        %s863 = vtos %v862
        %v864 = vstv %s863
        %v865 = vmul.f32 %v857, %v864
        %866 = vst [vmem:[%s415] sm:$0x1] %v865
        %s867 = sand.u32 %s225, 1
        %s868 = scalar_lea.sflag [#allocation7], %s867
        %s869 = sand.u32 %s225, 1
        %s870 = scalar_lea.vmem [#allocation14], %s869
        // Predicated region
        $region73: #{tpu_custom_call.1} parent=51 // pred_check
          %p871 = pneg %p235
        $region74: #{tpu_custom_call.1} parent=51 // pred_check_branch
          %873 = sbr.rel (%p871) target = $region76
        $region75: #{tpu_custom_call.1} parent=51 // pred_region
          %s875 = ssub.s32 16, 16
          %876 = vsyncadd %s868, %s875
          %s877 = smul.addr %s39, 16
          %s878 = scalar_lea.hbm %s10, %s877
          %s880 = sshll.u32 %s870, 4
          %s881 = int_to_ptr.vmem [resolvable:$true] %s880
          %883 = dma.vmem_to_hbm [thread:$0]  %s881, 16, %s878, %s868
        $region76: #{tpu_custom_call.1} parent=51 // pred_fallthru
          _
      $region52: #{tpu_custom_call.1} parent=5 // pred_fallthru
        _
      %p884 = scmp.le.s32.totalorder 2, %s34
      // Predicated region
      $region77: #{tpu_custom_call.1} parent=5 // pred_check
        %p885 = pneg %p884
      $region78: #{tpu_custom_call.1} parent=5 // pred_check_branch
        %887 = sbr.rel (%p885) target = $region80
      $region79: #{tpu_custom_call.1} parent=5 // pred_region
        %s888 = ssub.s32 %s34, 2
        // Predicated region
        $region81: #{tpu_custom_call.1} parent=79 // pred_check
          %p889 = pneg %p241
        $region82: #{tpu_custom_call.1} parent=79 // pred_check_branch
          %891 = sbr.rel (%p889) target = $region84
        $region83: #{tpu_custom_call.1} parent=79 // pred_region
          %s892 = sand.u32 %s226, 1
          %s893 = scalar_lea.sflag [#allocation7], %s892
          %s894 = sand.u32 %s226, 1
          %s895 = scalar_lea.vmem [#allocation14], %s894
          %896 = dma.done %s893, 16
        $region84: #{tpu_custom_call.1} parent=79 // pred_fallthru
          _
      $region80: #{tpu_custom_call.1} parent=5 // pred_fallthru
        _
    $region6: #{tpu_custom_call.1} parent=1 // loop_footer
      %s38 = sadd.s32 1, %s34
    $region7: #{tpu_custom_call.1} parent=1 // loop_footer_branch
      %33 = sbr.rel target = $region3
    $region8: #{tpu_custom_call.1} parent=1 // loop_exit
      _
    %897 = vsyncpa [#allocation6], 1
    %s898 = scalar_lea.sflag [#allocation6], 1
    %899 = vsyncpa %s898, 1
    %900 = vsyncpa [#allocation9], 1
    %s901 = scalar_lea.sflag [#allocation9], 1
    %902 = vsyncpa %s901, 1
    %903 = vsyncpa [#allocation12], 1
    %904 = vsyncpa [#allocation7], 1
    %s905 = scalar_lea.sflag [#allocation7], 1
    %906 = vsyncpa %s905, 1

</llo_original>
